<compile_context>
chip_gen: v5e
topology: v5e:2x2
jax: 0.10.0
libtpu: 0.0.40
codegen_flags: <defaults>
</compile_context>

<pallas_src>
import functools

import jax
import jax.numpy as jnp
from jax import lax
from jax.experimental import pallas as pl
from jax.experimental.pallas import tpu as pltpu


def _round_up(x, m):
    return (x + m - 1) // m * m


# ----------------------------- Pallas kernel -------------------------------
def _fused_conv_kernel(xp_ref, w_ref, b_ref, o_ref):
    """One grid step = one (TM, TN) tile of the flattened conv output.

    xp_ref : (TM, Kdim)  bf16 im2col patch rows (Kdim = Kmax*Kmax*Cin)
    w_ref  : (Kdim, TN)  bf16 fused weight tile (all scales, zero-embedded)
    b_ref  : (1, TN)     f32 fused bias tile
    o_ref  : (TM, TN)    f32 output tile (lane-dense, TN % 128 == 0)
    """
    acc = jnp.dot(xp_ref[...], w_ref[...], preferred_element_type=jnp.float32)
    o_ref[...] = (acc + b_ref[...]).astype(o_ref.dtype)


def _pick_tiles(M, Kdim, Cout_pad, vmem_budget=8 * 1024 * 1024):
    """Largest TM (<=1024, multiple of 8) whose double-buffered tiles fit the budget."""
    tn = Cout_pad if Cout_pad <= 512 else 128          # lane-dense Cout tile
    row_bytes = 2 * (Kdim * 2 + tn * 4)                # double-buffered patch + out rows
    w_bytes = 2 * (Kdim * tn * 2 + tn * 4)             # resident weight + bias tiles
    tm_cap = max((vmem_budget - w_bytes) // row_bytes, 8) // 8 * 8
    tm = int(min(1024, tm_cap, _round_up(M, 8)))
    return tm, tn


def _fused_conv_matmul(x_patches, w, b, tm, tn):
    """x_patches: (M_pad, Kdim) bf16, w: (Kdim, Cout_pad) bf16, b: (1, Cout_pad) f32."""
    M_pad, Kdim = x_patches.shape
    Cout_pad = w.shape[-1]
    return pl.pallas_call(
        _fused_conv_kernel,
        out_shape=jax.ShapeDtypeStruct((M_pad, Cout_pad), jnp.float32),
        grid=(M_pad // tm, Cout_pad // tn),
        in_specs=[
            # Patch tile: constant along the inner (j) axis -> fetched once per i,
            # stays resident while the small weight tiles stream.
            pl.BlockSpec((tm, Kdim), lambda i, j: (i, 0)),
            pl.BlockSpec((Kdim, tn), lambda i, j: (0, j)),
            pl.BlockSpec((1, tn), lambda i, j: (0, j)),
        ],
        out_specs=pl.BlockSpec((tm, tn), lambda i, j: (i, j)),
        compiler_params=pltpu.CompilerParams(
            dimension_semantics=("parallel", "parallel"),
        ),
    )(x_patches, w, b)


# ------------------------------ JAX wrapper --------------------------------
def init_cross_embed_params(key, dim_in, kernel_sizes, dim_out=None, stride=2):
    """Deterministic synthetic params, mirroring CrossEmbedLayer.__init__."""
    assert all(k % 2 == stride % 2 for k in kernel_sizes)
    dim_out = dim_out if dim_out is not None else dim_in
    kernel_sizes = sorted(kernel_sizes)
    num_scales = len(kernel_sizes)
    dim_scales = [int(dim_out / 2 ** i) for i in range(1, num_scales)]
    dim_scales = [*dim_scales, dim_out - sum(dim_scales)]

    params = []
    for k, d in zip(kernel_sizes, dim_scales):
        key, kw_, kb_ = jax.random.split(key, 3)
        # PyTorch Conv2d weight layout: (Cout, Cin, K, K)
        w = jax.random.normal(kw_, (d, dim_in, k, k), jnp.float32) * 0.1
        bb = jax.random.normal(kb_, (d,), jnp.float32) * 0.1
        params.append({"kernel": k, "weight": w, "bias": bb})
    return params, stride


def cross_embed_forward(x_nchw, params, stride, *, compute_dtype=jnp.bfloat16):
    """Equivalent of CrossEmbedLayer.forward; (N, Cin, H, W) -> (N, Cout, Ho, Wo)."""
    N, Cin, H, W = x_nchw.shape
    Kmax = max(p["kernel"] for p in params)
    pad_max = (Kmax - stride) // 2
    Ho = (H + 2 * pad_max - Kmax) // stride + 1   # same for every scale by construction
    Wo = (W + 2 * pad_max - Kmax) // stride + 1
    M = N * Ho * Wo
    Kdim = Kmax * Kmax * Cin
    Cout_total = sum(p["weight"].shape[0] for p in params)
    Cout_pad = _round_up(Cout_total, 128)         # lane-dense output

    # ---- fuse all scales into one centered Kmax x Kmax weight (glue) ----
    w_fused = jnp.zeros((Kmax, Kmax, Cin, Cout_pad), jnp.float32)
    b_fused = jnp.zeros((Cout_pad,), jnp.float32)
    c0 = 0
    for p in params:
        K = p["kernel"]
        Cout_i = p["weight"].shape[0]
        off = (Kmax - K) // 2
        w_khwc = jnp.transpose(p["weight"], (2, 3, 1, 0))        # (K, K, Cin, Cout_i)
        w_fused = w_fused.at[off:off + K, off:off + K, :, c0:c0 + Cout_i].set(w_khwc)
        b_fused = b_fused.at[c0:c0 + Cout_i].set(p["bias"])
        c0 += Cout_i
    w_fused = w_fused.reshape(Kdim, Cout_pad).astype(compute_dtype)
    b_fused = b_fused.reshape(1, Cout_pad)

    # ---- single im2col at Kmax (bf16, halves the patch-slab traffic) ----
    x = jnp.transpose(x_nchw, (0, 2, 3, 1)).astype(compute_dtype)  # NHWC
    xp = jnp.pad(x, ((0, 0), (pad_max, pad_max), (pad_max, pad_max), (0, 0)))
    taps = []
    for kh in range(Kmax):
        for kw in range(Kmax):
            taps.append(xp[:, kh:kh + stride * Ho:stride,
                           kw:kw + stride * Wo:stride, :])         # (N,Ho,Wo,Cin)
    patches = jnp.stack(taps, axis=3).reshape(M, Kdim)             # (M, Kmax*Kmax*Cin)

    # ---- tile M / Cout under a VMEM budget ----
    TM, TN = _pick_tiles(M, Kdim, Cout_pad)
    M_pad = _round_up(M, TM)
    if M_pad != M:
        patches = jnp.pad(patches, ((0, M_pad - M), (0, 0)))

    y = _fused_conv_matmul(patches, w_fused, b_fused, TM, TN)      # (M_pad, Cout_pad)
    y = y[:M, :Cout_total].reshape(N, Ho, Wo, Cout_total)
    return jnp.transpose(y, (0, 3, 1, 2))                          # back to NCHW


def cross_embed_reference(x_nchw, params, stride, *, compute_dtype=jnp.bfloat16):
    """Pure-JAX reference (lax conv, same bf16 input/weight quantization)."""
    xq = x_nchw.astype(compute_dtype).astype(jnp.float32)
    outs = []
    for p in params:
        K = p["kernel"]
        pad = (K - stride) // 2
        wq = p["weight"].astype(compute_dtype).astype(jnp.float32)
        o = lax.conv_general_dilated(
            xq, wq,
            window_strides=(stride, stride),
            padding=[(pad, pad), (pad, pad)],
            dimension_numbers=("NCHW", "OIHW", "NCHW"),
            precision=lax.Precision.HIGHEST,
        )
        outs.append(o + p["bias"].reshape(1, -1, 1, 1))
    return jnp.concatenate(outs, axis=1)


def _run_case(key, N, Cin, H, W, dim_out, kernel_sizes, stride):
    k_in, k_par = jax.random.split(key)
    x = jax.random.normal(k_in, (N, Cin, H, W), jnp.float32)
    params, stride = init_cross_embed_params(
        k_par, Cin, kernel_sizes, dim_out=dim_out, stride=stride)

    fwd = jax.jit(functools.partial(cross_embed_forward, params=params, stride=stride))
    y = fwd(x)
    jax.block_until_ready(y)

    y_ref = cross_embed_reference(x, params, stride)
    Ho = (H - stride) // stride + 1
    Wo = (W - stride) // stride + 1
    assert y.shape == (N, dim_out, Ho, Wo), y.shape
    max_err = float(jnp.max(jnp.abs(y - y_ref)))
    assert jnp.allclose(y, y_ref, atol=1e-4, rtol=1e-4), max_err
    return max_err


# --------------------------------- main -------------------------------------
if __name__ == "__main__":
    key = jax.random.PRNGKey(0)
    k0, k1 = jax.random.split(key)

    # Primary config: stride-2 stem, even kernels (parity matches stride).
    _run_case(k0, N=2, Cin=4, H=16, W=16, dim_out=8,
              kernel_sizes=(2, 4, 6), stride=2)

    # Secondary config: stride-1 path, odd kernels, non-aligned M / Cout
    # (exercises the M-pad and Cout-pad branches).
    _run_case(k1, N=2, Cin=3, H=9, W=9, dim_out=6,
              kernel_sizes=(1, 3, 5), stride=1)

    print("KERNEL_OK")
</pallas_src>

<mosaic_0001>
module attributes {stable_mosaic.version = 11 : i64} {
  func.func @_fused_conv_kernel(%arg0: i32, %arg1: i32, %arg2: memref<128x144xbf16, #tpu.memory_space<vmem>>, %arg3: memref<144x128xbf16, #tpu.memory_space<vmem>>, %arg4: memref<1x128xf32, #tpu.memory_space<vmem>>, %arg5: memref<128x128xf32, #tpu.memory_space<vmem>>) attributes {dimension_semantics = [#tpu.dimension_semantics<parallel>, #tpu.dimension_semantics<parallel>], iteration_bounds = array<i64: 1, 1>, scalar_prefetch = 0 : i64, scratch_operands = 0 : i64, tpu.core_type = #tpu.core_type<tc>, window_params = [{transform_indices = @transform_0, window_bounds = array<i64: 128, 144>}, {transform_indices = @transform_1, window_bounds = array<i64: 144, 128>}, {transform_indices = @transform_2, window_bounds = array<i64: 1, 128>}, {transform_indices = @transform_3, window_bounds = array<i64: 128, 128>}]} {
    %c0 = arith.constant 0 : index
    %c0_0 = arith.constant 0 : index
    %0 = vector.load %arg2[%c0, %c0_0] : memref<128x144xbf16, #tpu.memory_space<vmem>>, vector<128x144xbf16>
    %c0_1 = arith.constant 0 : index
    %c0_2 = arith.constant 0 : index
    %1 = vector.load %arg3[%c0_1, %c0_2] : memref<144x128xbf16, #tpu.memory_space<vmem>>, vector<144x128xbf16>
    %cst = arith.constant dense<0.000000e+00> : vector<128x128xf32>
    %2 = tpu.matmul %0, %1, %cst {dimension_numbers = #tpu.dot_dimension_numbers<[1], [0], [0], [1], [0, 0, 1, 1], [], []>} : vector<128x144xbf16>, vector<144x128xbf16>, vector<128x128xf32> -> vector<128x128xf32>
    %c0_3 = arith.constant 0 : index
    %c0_4 = arith.constant 0 : index
    %3 = vector.load %arg4[%c0_3, %c0_4] : memref<1x128xf32, #tpu.memory_space<vmem>>, vector<1x128xf32>
    %4 = vector.broadcast %3 : vector<1x128xf32> to vector<128x128xf32>
    %5 = arith.addf %2, %4 : vector<128x128xf32>
    %c0_5 = arith.constant 0 : index
    %c0_6 = arith.constant 0 : index
    %6 = vector.load %arg5[%c0_5, %c0_6] : memref<128x128xf32, #tpu.memory_space<vmem>>, vector<128x128xf32>
    tpu.vector_store %arg5[%c0_5, %c0_6], %5 {strides = array<i32>} : memref<128x128xf32, #tpu.memory_space<vmem>>, vector<128x128xf32>,
    return
  }
  func.func @transform_0(%arg0: i32, %arg1: i32) -> (i32, i32) {
    %c0_i32 = arith.constant 0 : i32
    %c0_i32_0 = arith.constant 0 : i32
    return %arg0, %c0_i32 : i32, i32
  }
  func.func @transform_1(%arg0: i32, %arg1: i32) -> (i32, i32) {
    %c0_i32 = arith.constant 0 : i32
    %c0_i32_0 = arith.constant 0 : i32
    return %c0_i32, %arg1 : i32, i32
  }
  func.func @transform_2(%arg0: i32, %arg1: i32) -> (i32, i32) {
    %c0_i32 = arith.constant 0 : i32
    %c0_i32_0 = arith.constant 0 : i32
    return %c0_i32, %arg1 : i32, i32
  }
  func.func @transform_3(%arg0: i32, %arg1: i32) -> (i32, i32) {
    %c0_i32 = arith.constant 0 : i32
    return %arg0, %arg1 : i32, i32
  }
}

</mosaic_0001>

<llo_original>
// kernel: cross_embed_forward.1
$region0: #{cross_embed_forward.1}
  #allocation0 [shape = 'u32[]', space=smem, size = 0x4, offset = 0x4, fixed_abs, tag = 'smem constant byte address 0x4 - core index']
  #allocation1 [shape = 'u32[72,128]{1,0:T(1,128)}', space=vmem, size = 0x9000, scoped, tag = 'internal scratch']
  %s0 = inlined_call_operand.vmem [shape: bf16[128,144], index: 0, kind: input, shape index: {}]
  %s1 = inlined_call_operand.vmem [shape: bf16[144,128], index: 1, kind: input, shape index: {}]
  %s2 = inlined_call_operand.vmem [shape: f32[1,128], index: 2, kind: input, shape index: {}]
  %s3 = inlined_call_operand.vmem [shape: f32[128,128], index: 3, kind: output, shape index: {}]
  %s4 = sld [smem:[#allocation0]]
  $region22: #{cross_embed_forward.1} parent=0
    _
  %s6 = ssub.s32 1, %s4
  %s7 = scalar_select 0, %s6, %s4
  // Predicated region
  $region2: #{cross_embed_forward.1} parent=0 // pred_check
    _
  $region3: #{cross_embed_forward.1} parent=0 // pred_check_branch
    %9 = sbr.rel (0) target = $region5
  $region4: #{cross_embed_forward.1} parent=0 // pred_region
    _
  $region5: #{cross_embed_forward.1} parent=0 // pred_fallthru
    _
  // Predicated region
  $region6: #{cross_embed_forward.1} parent=0 // pred_check
    _
  $region7: #{cross_embed_forward.1} parent=0 // pred_check_branch
    %11 = sbr.rel (0) target = $region9
  $region8: #{cross_embed_forward.1} parent=0 // pred_region
    _
  $region9: #{cross_embed_forward.1} parent=0 // pred_fallthru
    _
  // Predicated region
  $region10: #{cross_embed_forward.1} parent=0 // pred_check
    _
  $region11: #{cross_embed_forward.1} parent=0 // pred_check_branch
    %13 = sbr.rel (0) target = $region13
  $region12: #{cross_embed_forward.1} parent=0 // pred_region
    _
  $region13: #{cross_embed_forward.1} parent=0 // pred_fallthru
    _
  %v15 = vld [vmem:[%s0] sm:$0xff]
  %v16 = vld [vmem:[%s0 + $0x8] sm:$0xff]
  %v17 = vld [vmem:[%s0 + $0x10] sm:$0xff]
  %v18 = vld [vmem:[%s0 + $0x18] sm:$0xff]
  %v19 = vld [vmem:[%s0 + $0x20] sm:$0xff]
  %v20 = vld [vmem:[%s0 + $0x28] sm:$0xff]
  %v21 = vld [vmem:[%s0 + $0x30] sm:$0xff]
  %v22 = vld [vmem:[%s0 + $0x38] sm:$0xff]
  %v23 = vld [vmem:[%s0 + $0x40] sm:$0xff]
  %v24 = vld [vmem:[%s0 + $0x48] sm:$0xff]
  %v25 = vld [vmem:[%s0 + $0x50] sm:$0xff]
  %v26 = vld [vmem:[%s0 + $0x58] sm:$0xff]
  %v27 = vld [vmem:[%s0 + $0x60] sm:$0xff]
  %v28 = vld [vmem:[%s0 + $0x68] sm:$0xff]
  %v29 = vld [vmem:[%s0 + $0x70] sm:$0xff]
  %v30 = vld [vmem:[%s0 + $0x78] sm:$0xff]
  %v31 = vld [vmem:[%s1] sm:$0xf]
  %v32 = vld [vmem:[%s1 + $0x4] sm:$0xf]
  %v33 = vld [vmem:[%s1 + $0x8] sm:$0xf]
  %v34 = vld [vmem:[%s1 + $0xc] sm:$0xf]
  %v35 = vld [vmem:[%s1 + $0x10] sm:$0xf]
  %v36 = vld [vmem:[%s1 + $0x14] sm:$0xf]
  %v37 = vld [vmem:[%s1 + $0x18] sm:$0xf]
  %v38 = vld [vmem:[%s1 + $0x1c] sm:$0xf]
  %v39 = vld [vmem:[%s1 + $0x20] sm:$0xf]
  %v40 = vld [vmem:[%s1 + $0x24] sm:$0xf]
  %v41 = vld [vmem:[%s1 + $0x28] sm:$0xf]
  %v42 = vld [vmem:[%s1 + $0x2c] sm:$0xf]
  %v43 = vld [vmem:[%s1 + $0x30] sm:$0xf]
  %v44 = vld [vmem:[%s1 + $0x34] sm:$0xf]
  %v45 = vld [vmem:[%s1 + $0x38] sm:$0xf]
  %v46 = vld [vmem:[%s1 + $0x3c] sm:$0xf]
  %v47 = vld [vmem:[%s1 + $0x40] sm:$0xf]
  %v48 = vld [vmem:[%s1 + $0x44] sm:$0xf]
  %v49 = vld [vmem:[%s2] sm:$0x1]
  %v51 = vperm.slane %v49, 0
  %v69 = vunpack.c.l.b16 %v15
  %v70 = vunpack.c.h.b16 %v15
  %v71 = vunpack.c.l.b16 %v16
  %v72 = vunpack.c.h.b16 %v16
  %v73 = vunpack.c.l.b16 %v17
  %v74 = vunpack.c.h.b16 %v17
  %v75 = vunpack.c.l.b16 %v18
  %v76 = vunpack.c.h.b16 %v18
  %v77 = vunpack.c.l.b16 %v19
  %v78 = vunpack.c.h.b16 %v19
  %v79 = vunpack.c.l.b16 %v20
  %v80 = vunpack.c.h.b16 %v20
  %v81 = vunpack.c.l.b16 %v21
  %v82 = vunpack.c.h.b16 %v21
  %v83 = vunpack.c.l.b16 %v22
  %v84 = vunpack.c.h.b16 %v22
  %v85 = vunpack.c.l.b16 %v23
  %v86 = vunpack.c.h.b16 %v23
  %v87 = vunpack.c.l.b16 %v24
  %v88 = vunpack.c.h.b16 %v24
  %v89 = vunpack.c.l.b16 %v25
  %v90 = vunpack.c.h.b16 %v25
  %v91 = vunpack.c.l.b16 %v26
  %v92 = vunpack.c.h.b16 %v26
  %v93 = vunpack.c.l.b16 %v27
  %v94 = vunpack.c.h.b16 %v27
  %v95 = vunpack.c.l.b16 %v28
  %v96 = vunpack.c.h.b16 %v28
  %v97 = vunpack.c.l.b16 %v29
  %v98 = vunpack.c.h.b16 %v29
  %v99 = vunpack.c.l.b16 %v30
  %v100 = vunpack.c.h.b16 %v30
  %v101 = vpack.c.b16 %v71, %v69
  %v102 = vpack.c.b16 %v72, %v70
  %v103 = vpack.c.b16 %v75, %v73
  %v104 = vpack.c.b16 %v76, %v74
  %v105 = vpack.c.b16 %v79, %v77
  %v106 = vpack.c.b16 %v80, %v78
  %v107 = vpack.c.b16 %v83, %v81
  %v108 = vpack.c.b16 %v84, %v82
  %v109 = vpack.c.b16 %v87, %v85
  %v110 = vpack.c.b16 %v88, %v86
  %v111 = vpack.c.b16 %v91, %v89
  %v112 = vpack.c.b16 %v92, %v90
  %v113 = vpack.c.b16 %v95, %v93
  %v114 = vpack.c.b16 %v96, %v94
  %v115 = vpack.c.b16 %v99, %v97
  %v116 = vpack.c.b16 %v100, %v98
  %v143 = vunpack.c.l.b16 %v31
  %v144 = vunpack.c.l.b16 %v32
  %v145 = vunpack.c.l.b16 %v33
  %v146 = vunpack.c.l.b16 %v34
  %v147 = vunpack.c.l.b16 %v35
  %v148 = vunpack.c.l.b16 %v36
  %v149 = vunpack.c.l.b16 %v37
  %v150 = vunpack.c.l.b16 %v38
  %v151 = vunpack.c.l.b16 %v39
  %v152 = vunpack.c.l.b16 %v40
  %v153 = vunpack.c.l.b16 %v41
  %v154 = vunpack.c.l.b16 %v42
  %v155 = vunpack.c.l.b16 %v43
  %v156 = vunpack.c.l.b16 %v44
  %v157 = vunpack.c.l.b16 %v45
  %v158 = vunpack.c.l.b16 %v46
  %v159 = vunpack.c.l.b16 %v47
  %v160 = vunpack.c.l.b16 %v48
  %v161 = vpack.c.b16 %v144, %v143
  %v162 = vpack.c.b16 %v146, %v145
  %v163 = vpack.c.b16 %v148, %v147
  %v164 = vpack.c.b16 %v150, %v149
  %v165 = vpack.c.b16 %v152, %v151
  %v166 = vpack.c.b16 %v154, %v153
  %v167 = vpack.c.b16 %v156, %v155
  %v168 = vpack.c.b16 %v158, %v157
  %v169 = vpack.c.b16 %v160, %v159
  %vm179 = vcmask 130048
  %v181 = vsel %vm179, %v102, 0
  %v184 = vsel %vm179, %v104, 0
  %v187 = vsel %vm179, %v106, 0
  %v190 = vsel %vm179, %v108, 0
  %v193 = vsel %vm179, %v110, 0
  %v196 = vsel %vm179, %v112, 0
  %v199 = vsel %vm179, %v114, 0
  %v202 = vsel %vm179, %v116, 0
  %204 = vmatpush.bf16.msra.mxu0 %v168
  %205 = vmatpush.bf16.msra.mxu0 %v167
  %206 = vmatpush.bf16.msra.mxu0 %v166
  %207 = vmatpush.bf16.msra.mxu0 %v165
  %208 = vmatpush.bf16.msra.mxu0 %v164
  %209 = vmatpush.bf16.msra.mxu0 %v163
  %210 = vmatpush.bf16.msra.mxu0 %v162
  %211 = vmatpush.bf16.msra.mxu0 %v161
  %212 = vmatmul.bf16.gmra.mxu0 %v101
  %v213 = vpop.f32.mrf.mxu0
  %v214 = vadd.f32 %v51, %v213
  %v215 = vpop.f32.mrf.mxu0
  %v216 = vadd.f32 %v51, %v215
  %217 = vmatmul.bf16.gmra.mxu0 %v103
  %v218 = vpop.f32.mrf.mxu0
  %v219 = vadd.f32 %v51, %v218
  %v220 = vpop.f32.mrf.mxu0
  %v221 = vadd.f32 %v51, %v220
  %222 = vmatmul.bf16.gmra.mxu0 %v105
  %v223 = vpop.f32.mrf.mxu0
  %v224 = vadd.f32 %v51, %v223
  %v225 = vpop.f32.mrf.mxu0
  %v226 = vadd.f32 %v51, %v225
  %227 = vmatmul.bf16.gmra.mxu0 %v107
  %v228 = vpop.f32.mrf.mxu0
  %v229 = vadd.f32 %v51, %v228
  %v230 = vpop.f32.mrf.mxu0
  %v231 = vadd.f32 %v51, %v230
  %232 = vmatmul.bf16.gmra.mxu0 %v109
  %v233 = vpop.f32.mrf.mxu0
  %v234 = vadd.f32 %v51, %v233
  %v235 = vpop.f32.mrf.mxu0
  %v236 = vadd.f32 %v51, %v235
  %237 = vmatmul.bf16.gmra.mxu0 %v111
  %v238 = vpop.f32.mrf.mxu0
  %v239 = vadd.f32 %v51, %v238
  %v240 = vpop.f32.mrf.mxu0
  %v241 = vadd.f32 %v51, %v240
  %242 = vmatmul.bf16.gmra.mxu0 %v113
  %v243 = vpop.f32.mrf.mxu0
  %v244 = vadd.f32 %v51, %v243
  %v245 = vpop.f32.mrf.mxu0
  %v246 = vadd.f32 %v51, %v245
  %247 = vmatmul.bf16.gmra.mxu0 %v115
  %v248 = vpop.f32.mrf.mxu0
  %v249 = vadd.f32 %v51, %v248
  %v250 = vpop.f32.mrf.mxu0
  %v251 = vadd.f32 %v51, %v250
  %252 = vdwg.mxu0
  %253 = vmatpush.bf16.msra.mxu0 0
  %254 = vmatpush.bf16.msra.mxu0 0
  %255 = vmatpush.bf16.msra.mxu0 0
  %256 = vmatpush.bf16.msra.mxu0 0
  %257 = vmatpush.bf16.msra.mxu0 0
  %258 = vmatpush.bf16.msra.mxu0 0
  %259 = vmatpush.bf16.msra.mxu0 0
  %260 = vmatpush.bf16.msra.mxu0 %v169
  %261 = vmatmul.bf16.gmra.mxu0 %v181
  %v262 = vpop.f32.mrf.mxu0
  %v263 = vadd.f32 %v214, %v262
  %v264 = vpop.f32.mrf.mxu0
  %v265 = vadd.f32 %v216, %v264
  %266 = vmatmul.bf16.gmra.mxu0 %v184
  %v267 = vpop.f32.mrf.mxu0
  %v268 = vadd.f32 %v219, %v267
  %v269 = vpop.f32.mrf.mxu0
  %v270 = vadd.f32 %v221, %v269
  %271 = vmatmul.bf16.gmra.mxu0 %v187
  %v272 = vpop.f32.mrf.mxu0
  %v273 = vadd.f32 %v224, %v272
  %v274 = vpop.f32.mrf.mxu0
  %v275 = vadd.f32 %v226, %v274
  %276 = vmatmul.bf16.gmra.mxu0 %v190
  %v277 = vpop.f32.mrf.mxu0
  %v278 = vadd.f32 %v229, %v277
  %v279 = vpop.f32.mrf.mxu0
  %v280 = vadd.f32 %v231, %v279
  %281 = vmatmul.bf16.gmra.mxu0 %v193
  %v282 = vpop.f32.mrf.mxu0
  %v283 = vadd.f32 %v234, %v282
  %v284 = vpop.f32.mrf.mxu0
  %v285 = vadd.f32 %v236, %v284
  %286 = vmatmul.bf16.gmra.mxu0 %v196
  %v287 = vpop.f32.mrf.mxu0
  %v288 = vadd.f32 %v239, %v287
  %v289 = vpop.f32.mrf.mxu0
  %v290 = vadd.f32 %v241, %v289
  %291 = vmatmul.bf16.gmra.mxu0 %v199
  %v292 = vpop.f32.mrf.mxu0
  %v293 = vadd.f32 %v244, %v292
  %v294 = vpop.f32.mrf.mxu0
  %v295 = vadd.f32 %v246, %v294
  %296 = vmatmul.bf16.gmra.mxu0 %v202
  %v297 = vpop.f32.mrf.mxu0
  %v298 = vadd.f32 %v249, %v297
  %v299 = vpop.f32.mrf.mxu0
  %v300 = vadd.f32 %v251, %v299
  %301 = vdwg.mxu0
  %302 = vst [vmem:[%s3] sm:$0xff] %v263
  %303 = vst [vmem:[%s3 + $0x8] sm:$0xff] %v265
  %304 = vst [vmem:[%s3 + $0x10] sm:$0xff] %v268
  %305 = vst [vmem:[%s3 + $0x18] sm:$0xff] %v270
  %306 = vst [vmem:[%s3 + $0x20] sm:$0xff] %v273
  %307 = vst [vmem:[%s3 + $0x28] sm:$0xff] %v275
  %308 = vst [vmem:[%s3 + $0x30] sm:$0xff] %v278
  %309 = vst [vmem:[%s3 + $0x38] sm:$0xff] %v280
  %310 = vst [vmem:[%s3 + $0x40] sm:$0xff] %v283
  %311 = vst [vmem:[%s3 + $0x48] sm:$0xff] %v285
  %312 = vst [vmem:[%s3 + $0x50] sm:$0xff] %v288
  %313 = vst [vmem:[%s3 + $0x58] sm:$0xff] %v290
  %314 = vst [vmem:[%s3 + $0x60] sm:$0xff] %v293
  %315 = vst [vmem:[%s3 + $0x68] sm:$0xff] %v295
  %316 = vst [vmem:[%s3 + $0x70] sm:$0xff] %v298
  %317 = vst [vmem:[%s3 + $0x78] sm:$0xff] %v300
  // Predicated region
  $region14: #{cross_embed_forward.1} parent=0 // pred_check
    _
  $region15: #{cross_embed_forward.1} parent=0 // pred_check_branch
    %319 = sbr.rel (0) target = $region17
  $region16: #{cross_embed_forward.1} parent=0 // pred_region
    _
  $region17: #{cross_embed_forward.1} parent=0 // pred_fallthru
    _
  // Predicated region
  $region18: #{cross_embed_forward.1} parent=0 // pred_check
    _
  $region19: #{cross_embed_forward.1} parent=0 // pred_check_branch
    %321 = sbr.rel (0) target = $region21
  $region20: #{cross_embed_forward.1} parent=0 // pred_region
    _
  $region21: #{cross_embed_forward.1} parent=0 // pred_fallthru
    _

</llo_original>
